<compile_context>
chip_gen: v5e
topology: v5e:2x2
jax: 0.10.0
libtpu: 0.0.40
codegen_flags: <defaults>
</compile_context>

<pallas_src>
import jax
import jax.numpy as jnp
from jax.experimental import pallas as pl
from jax.experimental.pallas import tpu as pltpu


def _linear_kernel(x_ref, w_ref, b_ref, o_ref):
    # x_ref: (TILE_B, D) VMEM    w_ref: (1, D) VMEM
    # b_ref: (1,)        SMEM    o_ref: (1, TILE_B) VMEM (lane-dense)
    x = x_ref[...].astype(jnp.float32)
    w = w_ref[...].astype(jnp.float32)           # (1, D) broadcasts over rows
    y = jnp.sum(x * w, axis=-1) + b_ref[0]       # VPU multiply + lane reduce (f32 acc)
    o_ref[...] = y[None, :].astype(o_ref.dtype)  # lane-dense (1, TILE_B) store


def _round_up(x: int, m: int) -> int:
    return (x + m - 1) // m * m


def _vmem_capacity_bytes() -> int:
    try:
        return int(pltpu.get_tpu_info().vmem_capacity_bytes)
    except Exception:
        return 64 << 20  # conservative: v7x has 64 MiB per TensorCore


def _choose_tile_b(batch: int, input_dim: int, itemsize: int) -> int:
    """Batch tile sized by a VMEM byte budget (lane-padded row footprint)."""
    d_pad = _round_up(input_dim, 128)            # real per-row VMEM footprint
    bytes_per_row = itemsize * d_pad
    cap = _vmem_capacity_bytes()
    # Per-buffer budget for the double-buffered x stream: 1/4 of VMEM, capped
    # at 16 MiB (2x16 = 32 MiB -> fits v7x's 64 MiB with ample headroom,
    # and multi-MiB tiles reach ~85-90% of the HBM roofline).
    budget = min(16 << 20, cap // 4)
    rows = max(128, (budget // bytes_per_row) // 128 * 128)

    if batch >= 256:
        # Guarantee >= 2 grid steps so the "parallel" axis can shard across
        # the two TensorCores on v7x; the extra grid step is noise elsewhere.
        half = _round_up(pl.cdiv(batch, 2), 128)
        return min(rows, half)
    # Small batch: single full-batch block (block dims == array dims) or
    # 128-row tiles if even that overflows the budget.
    return batch if batch <= rows else rows


def net_forward(x: jax.Array, weight: jax.Array, bias: jax.Array) -> jax.Array:
    """x: [B, D], weight: [1, D], bias: [1] -> [B, 1]."""
    B, D = x.shape
    itemsize = jnp.dtype(x.dtype).itemsize
    tile_b = _choose_tile_b(B, D, itemsize)
    grid = (pl.cdiv(B, tile_b),)

    # Raise the scoped-VMEM limit to cover the enlarged, lane-padded,
    # double-buffered tiles (+ headroom), clamped to physical VMEM.
    d_pad = _round_up(D, 128)
    x_bytes = 2 * tile_b * d_pad * itemsize
    w_bytes = 2 * 8 * d_pad * jnp.dtype(weight.dtype).itemsize
    o_bytes = 2 * 8 * _round_up(tile_b, 128) * itemsize
    vmem_limit = int(min(_vmem_capacity_bytes(),
                         max(16 << 20, x_bytes + w_bytes + o_bytes + (4 << 20))))

    out_row = pl.pallas_call(
        _linear_kernel,
        out_shape=jax.ShapeDtypeStruct((1, B), x.dtype),
        grid_spec=pltpu.PrefetchScalarGridSpec(
            num_scalar_prefetch=0,
            grid=grid,
            in_specs=[
                pl.BlockSpec((tile_b, D), lambda i: (i, 0)),          # x: batch-tiled
                pl.BlockSpec((1, D), lambda i: (0, 0)),               # w: VMEM-resident
                pl.BlockSpec(memory_space=pltpu.MemorySpace.SMEM),    # bias scalar
            ],
            out_specs=pl.BlockSpec((1, tile_b), lambda i: (0, i)),    # lane-dense out
        ),
        compiler_params=pltpu.CompilerParams(
            dimension_semantics=("parallel",),
            vmem_limit_bytes=vmem_limit,
        ),
        cost_estimate=pl.CostEstimate(
            flops=2 * B * D,
            bytes_accessed=itemsize * (B * D + B) + 4 * (D + 1),
            transcendentals=0,
        ),
    )(x, weight, bias.reshape(1).astype(jnp.float32))

    return out_row.reshape(B, 1)


if __name__ == "__main__":
    key = jax.random.PRNGKey(0)
    kx, kw, kb = jax.random.split(key, 3)

    batch = 8
    input_dim = 32

    # Deterministic parameter init mimicking nn.Linear default:
    # U(-1/sqrt(fan_in), 1/sqrt(fan_in))
    bound = 1.0 / jnp.sqrt(jnp.float32(input_dim))
    weight = jax.random.uniform(kw, (1, input_dim), jnp.float32, -bound, bound)
    bias = jax.random.uniform(kb, (1,), jnp.float32, -bound, bound)

    x = jax.random.normal(kx, (batch, input_dim), jnp.float32)

    out = net_forward(x, weight, bias)
    jax.block_until_ready(out)

    # correctness check against plain-JAX reference
    ref = x @ weight.T + bias
    assert out.shape == (batch, 1)
    assert jnp.allclose(out, ref, atol=1e-5), (out, ref)

    print("KERNEL_OK")
</pallas_src>

<mosaic_0001>
module attributes {stable_mosaic.version = 11 : i64} {
  func.func @_linear_kernel(%arg0: i32, %arg1: memref<8x32xf32, #tpu.memory_space<vmem>>, %arg2: memref<1x32xf32, #tpu.memory_space<vmem>>, %arg3: memref<1xf32, #tpu.memory_space<smem>>, %arg4: memref<1x8xf32, #tpu.memory_space<vmem>>) attributes {dimension_semantics = [#tpu.dimension_semantics<parallel>], iteration_bounds = array<i64: 1>, scalar_prefetch = 0 : i64, scratch_operands = 0 : i64, tpu.core_type = #tpu.core_type<tc>, window_params = [{transform_indices = @transform_0, window_bounds = array<i64: 8, 32>}, {pipeline_mode = #tpu.pipeline_mode<synchronous>, transform_indices = @transform_1, window_bounds = array<i64: 1, 32>}, {transform_indices = @transform_2, window_bounds = array<i64: 1>}, {transform_indices = @transform_3, window_bounds = array<i64: 1, 8>}]} {
    %c0 = arith.constant 0 : index
    %c0_0 = arith.constant 0 : index
    %0 = vector.load %arg1[%c0, %c0_0] : memref<8x32xf32, #tpu.memory_space<vmem>>, vector<8x32xf32>
    %c0_1 = arith.constant 0 : index
    %c0_2 = arith.constant 0 : index
    %1 = vector.load %arg2[%c0_1, %c0_2] : memref<1x32xf32, #tpu.memory_space<vmem>>, vector<1x32xf32>
    %2 = vector.broadcast %1 : vector<1x32xf32> to vector<8x32xf32>
    %3 = arith.mulf %0, %2 : vector<8x32xf32>
    %cst = arith.constant dense<0.000000e+00> : vector<8xf32>
    %4 = vector.multi_reduction <add>, %3, %cst [1] : vector<8x32xf32> to vector<8xf32>
    %c0_3 = arith.constant 0 : index
    %5 = memref.load %arg3[%c0_3] : memref<1xf32, #tpu.memory_space<smem>>
    %6 = vector.broadcast %5 : f32 to vector<8xf32>
    %7 = arith.addf %4, %6 : vector<8xf32>
    %8 = vector.shape_cast %7 : vector<8xf32> to vector<1x8xf32>
    %c0_4 = arith.constant 0 : index
    %c0_5 = arith.constant 0 : index
    %9 = vector.load %arg4[%c0_4, %c0_5] : memref<1x8xf32, #tpu.memory_space<vmem>>, vector<1x8xf32>
    tpu.vector_store %arg4[%c0_4, %c0_5], %8 {strides = array<i32>} : memref<1x8xf32, #tpu.memory_space<vmem>>, vector<1x8xf32>,
    return
  }
  func.func @transform_0(%arg0: i32) -> (i32, i32) {
    %c0_i32 = arith.constant 0 : i32
    %c0_i32_0 = arith.constant 0 : i32
    return %arg0, %c0_i32 : i32, i32
  }
  func.func @transform_1(%arg0: i32) -> (i32, i32) {
    %c0_i32 = arith.constant 0 : i32
    %c0_i32_0 = arith.constant 0 : i32
    %c0_i32_1 = arith.constant 0 : i32
    return %c0_i32, %c0_i32_0 : i32, i32
  }
  func.func @transform_2(%arg0: i32) -> i32 {
    %c0_i32 = arith.constant 0 : i32
    %c0_i32_0 = arith.constant 0 : i32
    return %c0_i32 : i32
  }
  func.func @transform_3(%arg0: i32) -> (i32, i32) {
    %c0_i32 = arith.constant 0 : i32
    %c0_i32_0 = arith.constant 0 : i32
    return %c0_i32, %arg0 : i32, i32
  }
}

</mosaic_0001>

<llo_original>
// kernel: tpu_custom_call.1
$region0: #{tpu_custom_call.1}
  #allocation0 [shape = 'u32[]', space=smem, size = 0x4, offset = 0x4, fixed_abs, tag = 'smem constant byte address 0x4 - core index']
  #allocation1 [shape = 'u32[72,128]{1,0:T(1,128)}', space=vmem, size = 0x9000, scoped, tag = 'internal scratch']
  #allocation2 [shape = 'f32[1]{0:T(128)S(6)}', space=smem, size = 0x200, scoped, tag = 'scoped memory for tpu_custom_call.1']
  %s0 = inlined_call_operand.hbm [shape: f32[8,32], index: 0, kind: input, shape index: {}]
  %s1 = inlined_call_operand.vmem [shape: f32[1,32], index: 1, kind: input, shape index: {}]
  %s2 = inlined_call_operand.<no memory space> [shape: f32[1], index: 2, kind: input, shape index: {}]
  %s3 = inlined_call_operand.hbm [shape: f32[1,8], index: 3, kind: output, shape index: {}]
  %s4 = sld [smem:[#allocation0]]
  $region26: #{tpu_custom_call.1} parent=0
    _
  %s6 = ssub.s32 1, %s4
  %s7 = scalar_select 0, %s6, %s4
  %8 = sst [smem:[#allocation2]] %s2
  $region1: #{tpu_custom_call.1} parent=0
    #allocation3 [shape = 'u8[4096]{0}', space=vmem, size = 0x1000, scoped, tag = 'input window, operand 0, single buffered']
    #allocation4 [shape = 's32[1]{0}', space=sflag, size = 0x4, scoped, tag = 'scoped memory for tpu_custom_call.1']
    #allocation5 [shape = 's32[1]{0}', space=sflag, size = 0x4, scoped, tag = 'scoped memory for tpu_custom_call.1']
    #allocation6 [shape = 'u8[512]{0}', space=vmem, size = 0x400, scoped, tag = 'output window, operand 0, single buffered']
    %9 = vsyncpa [#allocation4], 0
    %10 = vsyncpa [#allocation5], 0
    // Predicated region
    $region2: #{tpu_custom_call.1} parent=1 // pred_check
      _
    $region3: #{tpu_custom_call.1} parent=1 // pred_check_branch
      %12 = sbr.rel (0) target = $region5
    $region4: #{tpu_custom_call.1} parent=1 // pred_region
      %14 = vsyncadd [#allocation4], 0
      %s16 = sshll.u32 %s0, 4
      %s17 = int_to_ptr.hbm [resolvable:$true] %s16
      %s18 = sshll.u32 [#allocation3], 4
      %s19 = int_to_ptr.vmem [resolvable:$true] %s18
      %21 = dma.hbm_to_vmem [thread:$0]  %s17, 128, %s19, [#allocation4]
    $region5: #{tpu_custom_call.1} parent=1 // pred_fallthru
      _
    // Predicated region
    $region6: #{tpu_custom_call.1} parent=1 // pred_check
      _
    $region7: #{tpu_custom_call.1} parent=1 // pred_check_branch
      %23 = sbr.rel (0) target = $region9
    $region8: #{tpu_custom_call.1} parent=1 // pred_region
      _
    $region9: #{tpu_custom_call.1} parent=1 // pred_fallthru
      _
    // Predicated region
    $region10: #{tpu_custom_call.1} parent=1 // pred_check
      _
    $region11: #{tpu_custom_call.1} parent=1 // pred_check_branch
      %25 = sbr.rel (0) target = $region13
    $region12: #{tpu_custom_call.1} parent=1 // pred_region
      _
    $region13: #{tpu_custom_call.1} parent=1 // pred_fallthru
      _
    // Predicated region
    $region14: #{tpu_custom_call.1} parent=1 // pred_check
      _
    $region15: #{tpu_custom_call.1} parent=1 // pred_check_branch
      %27 = sbr.rel (0) target = $region17
    $region16: #{tpu_custom_call.1} parent=1 // pred_region
      %29 = dma.done [#allocation4], 128
    $region17: #{tpu_custom_call.1} parent=1 // pred_fallthru
      _
    %v30 = vld [vmem:[#allocation3] sm:$0xff]
    %v31 = vld [vmem:[%s1] sm:$0x1]
    %v33 = vperm.slane %v31, 0
    %v35 = vmul.f32 %v30, %v33
    %vm36 = vcmask 261120
    %v37 = vsel %vm36, %v35, 0.0
    %38 = vadd.xlane.f32.xlu0 %v37
    %v39 = vpop.xlane.xlu0 %38
    %s40 = sld [smem:[#allocation2]]
    %v41 = vstv %s40
    %v42 = vadd.f32 %v39, %v41
    %v44 = vlaneseq
    %v45 = vand.u32 %v44, 127
    %v46 = vperm.slane %v42, %v45
    %vm48 = vcmask 57344
    %49 = vst.msk [vmem:[#allocation6] sm:$0x1] %vm48, %v46
    // Predicated region
    $region18: #{tpu_custom_call.1} parent=1 // pred_check
      _
    $region19: #{tpu_custom_call.1} parent=1 // pred_check_branch
      %51 = sbr.rel (0) target = $region21
    $region20: #{tpu_custom_call.1} parent=1 // pred_region
      %53 = vsyncadd [#allocation5], 0
      %s55 = sshll.u32 [#allocation6], 4
      %s56 = int_to_ptr.vmem [resolvable:$true] %s55
      %s57 = sshll.u32 %s3, 4
      %s58 = int_to_ptr.hbm [resolvable:$true] %s57
      %60 = dma.vmem_to_hbm [thread:$0]  %s56, 16, %s58, [#allocation5]
    $region21: #{tpu_custom_call.1} parent=1 // pred_fallthru
      _
    // Predicated region
    $region22: #{tpu_custom_call.1} parent=1 // pred_check
      _
    $region23: #{tpu_custom_call.1} parent=1 // pred_check_branch
      %62 = sbr.rel (0) target = $region25
    $region24: #{tpu_custom_call.1} parent=1 // pred_region
      %64 = dma.done [#allocation5], 16
    $region25: #{tpu_custom_call.1} parent=1 // pred_fallthru
      _
    %65 = vsyncpa [#allocation4], 1
    %66 = vsyncpa [#allocation5], 1

</llo_original>
